<compile_context>
chip_gen: v5e
topology: v5e:2x2
jax: 0.10.0
libtpu: 0.0.40
codegen_flags: <defaults>
</compile_context>

<pallas_src>
import jax
import jax.numpy as jnp
from jax.experimental import pallas as pl
from jax.experimental.pallas import tpu as pltpu

EPS = 1e-5   # nn.BatchNorm1d default eps
LANE = 128   # TPU vreg lane width


def _round_up(n, m):
    return ((n + m - 1) // m) * m


# ----------------------------------------------------------------------------
# Kernel
# ----------------------------------------------------------------------------
def make_deepsurv_kernel(n_hidden, out_pads, compute_dtype):
    """Fused MLP: hidden layers of (matmul + bias + ReLU), then a lane-dense
    head matmul (w_head @ h^T) so the output store is unmasked."""

    def kernel(x_ref, *refs):
        w_refs = refs[:n_hidden]            # hidden weights, [K_l, H_l_pad]
        wh_ref = refs[n_hidden]             # head weights,   [8, H_last_pad]
        b_ref = refs[n_hidden + 1]          # packed biases,  [n_hidden+1, H_max] f32
        o_ref = refs[n_hidden + 2]          # output tile,    [8, tile_b] f32

        h = x_ref[...]
        for l in range(n_hidden):
            bias = b_ref[l:l + 1, :out_pads[l]]                  # (1, ow) f32
            h = jnp.dot(h, w_refs[l][...],
                        preferred_element_type=jnp.float32)      # f32 MXU acc
            # bias + ReLU in f32 (v5e VPU has no bf16); BN folded, Dropout=id.
            h = jnp.maximum(h + bias, 0.0)
            h = h.astype(compute_dtype)                          # next MXU pass

        # Head: (8, H) contracted with (tile_b, H) along H -> (8, tile_b).
        # Row 0 of wh_ref holds the real head weights; result is lane-dense.
        r = jax.lax.dot_general(
            wh_ref[...], h,
            dimension_numbers=(((1,), (1,)), ((), ())),
            preferred_element_type=jnp.float32)
        o_ref[...] = (r + b_ref[n_hidden:n_hidden + 1, 0:1]).astype(o_ref.dtype)

    return kernel


# ----------------------------------------------------------------------------
# Parameter init (PyTorch-style; weights stored as [in, out])
# ----------------------------------------------------------------------------
def init_params(key, in_features, hidden_layers, randomize_bn=False):
    params = {"hidden": [], "out": None}
    fan_in = in_features
    for h in hidden_layers:
        key, kw, kb, kg, kbe, km, kv = jax.random.split(key, 7)
        bound = 1.0 / jnp.sqrt(fan_in)
        w = jax.random.uniform(kw, (fan_in, h), jnp.float32, -bound, bound)
        b = jax.random.uniform(kb, (1, h), jnp.float32, -bound, bound)
        if randomize_bn:
            gamma = jax.random.uniform(kg, (1, h), jnp.float32, 0.5, 1.5)
            beta = 0.1 * jax.random.normal(kbe, (1, h), jnp.float32)
            mean = 0.1 * jax.random.normal(km, (1, h), jnp.float32)
            var = jax.random.uniform(kv, (1, h), jnp.float32, 0.5, 1.5)
        else:
            gamma = jnp.ones((1, h), jnp.float32)
            beta = jnp.zeros((1, h), jnp.float32)
            mean = jnp.zeros((1, h), jnp.float32)
            var = jnp.ones((1, h), jnp.float32)
        params["hidden"].append({"w": w, "b": b, "gamma": gamma, "beta": beta,
                                 "mean": mean, "var": var})
        fan_in = h
    key, kw, kb = jax.random.split(key, 3)
    bound = 1.0 / jnp.sqrt(fan_in)
    params["out"] = {
        "w": jax.random.uniform(kw, (fan_in, 1), jnp.float32, -bound, bound),
        "b": jax.random.uniform(kb, (1, 1), jnp.float32, -bound, bound),
    }
    return params


# ----------------------------------------------------------------------------
# BN folding (eval mode): BN follows ReLU, so it folds into the NEXT Linear.
#   y = s*z + t with s = gamma*rsqrt(var+eps), t = beta - mean*s
#   y @ W + b = z @ (s[:,None]*W) + (t @ W + b)
# ----------------------------------------------------------------------------
def _fold_bn(params):
    layers = []
    prev_s = prev_t = None
    for lp in params["hidden"]:
        w = lp["w"].astype(jnp.float32)
        b = lp["b"].reshape(-1).astype(jnp.float32)
        if prev_s is not None:
            b = b + prev_t @ w          # uses the ORIGINAL (unscaled) W
            w = w * prev_s[:, None]
        layers.append((w, b))
        s = lp["gamma"].reshape(-1) * jax.lax.rsqrt(lp["var"].reshape(-1) + EPS)
        t = lp["beta"].reshape(-1) - lp["mean"].reshape(-1) * s
        prev_s, prev_t = s, t
    w = params["out"]["w"].astype(jnp.float32)
    b = params["out"]["b"].reshape(-1).astype(jnp.float32)
    if prev_s is not None:
        b = b + prev_t @ w
        w = w * prev_s[:, None]
    layers.append((w, b))
    return layers


# ----------------------------------------------------------------------------
# One-time parameter prep: fold BN, pad, pack biases, cast to compute dtype.
# Call once after (re)loading parameters; reuse the result for every forward.
# ----------------------------------------------------------------------------
def prepare_params(params, compute_dtype=jnp.bfloat16):
    layers = _fold_bn(params)
    hidden = layers[:-1]
    w_head, b_head = layers[-1]
    n_hidden = len(hidden)
    in_features = hidden[0][0].shape[0]

    # Lane-pad hidden output widths to 128; input dim of layer 0 stays equal to
    # the (unpadded) feature dim so x needs no feature padding.
    out_pads = [_round_up(w.shape[1], LANE) for w, _ in hidden]
    in_pads = [in_features] + out_pads[:-1]
    max_out = max(out_pads)

    w_hidden = []
    b_pack = jnp.zeros((n_hidden + 1, max_out), jnp.float32)
    for l, (w, b) in enumerate(hidden):
        wp = jnp.zeros((in_pads[l], out_pads[l]), jnp.float32)
        wp = wp.at[:w.shape[0], :w.shape[1]].set(w)
        w_hidden.append(wp.astype(compute_dtype))
        b_pack = b_pack.at[l, :b.shape[0]].set(b)

    # Head weight laid out as (8, H_last_pad): row 0 real, rows 1..7 zero.
    h_last_pad = out_pads[-1]
    wh = jnp.zeros((8, h_last_pad), jnp.float32)
    wh = wh.at[0, :w_head.shape[0]].set(w_head[:, 0])
    wh = wh.astype(compute_dtype)
    b_pack = b_pack.at[n_hidden, 0].set(b_head[0])

    return {
        "w_hidden": w_hidden,
        "w_head": wh,
        "b_pack": b_pack,
        "in_features": in_features,
        "out_pads": tuple(out_pads),
        "n_hidden": n_hidden,
        "compute_dtype": compute_dtype,
    }


# ----------------------------------------------------------------------------
# tile_b auto-selection (per-generation heuristics from the review)
# ----------------------------------------------------------------------------
def _auto_tile_b(B):
    b8 = _round_up(max(B, 8), 8)
    try:
        kind = jax.devices()[0].device_kind.lower()
    except Exception:
        kind = ""
    multi_tc = ("v7" in kind) or ("7x" in kind)
    if multi_tc and b8 >= 16:
        # v7x: 2 TensorCores shard the "parallel" axis -> keep >= 2 grid steps.
        return min(512, _round_up((b8 + 1) // 2, 8))
    # v5e/v6e: single TC, grid steps are a serial loop (~0.35us each) -> one
    # large tile (<=512) amortizes overhead and feeds the 256x256 MXU (v6e).
    return min(512, b8)


# ----------------------------------------------------------------------------
# Wrapper (per-call: only x handling; all weight prep lives in prepare_params)
# ----------------------------------------------------------------------------
def deepsurv_forward(x, prepped, *, tile_b=None, single_buffer_weights=True):
    B, F = x.shape
    assert F == prepped["in_features"], (F, prepped["in_features"])
    dt = prepped["compute_dtype"]
    n_hidden = prepped["n_hidden"]
    out_pads = prepped["out_pads"]
    w_hidden = prepped["w_hidden"]
    w_head = prepped["w_head"]
    b_pack = prepped["b_pack"]

    if tile_b is None:
        tile_b = _auto_tile_b(B)
    tile_b = max(8, _round_up(min(tile_b, _round_up(B, 8)), 8))
    # TODO(synk): if tile_b is ever raised past 512, stage h through a VMEM
    # scratch between layers to bound activation live ranges / spills.
    B_pad = _round_up(B, tile_b)
    G = B_pad // tile_b

    # x: cast only; pad batch rows only when B is not a tile multiple. The
    # feature dim stays unpadded (full-extent last block dim is exempt).
    xd = x.astype(dt)
    if B_pad != B:
        xd = jnp.zeros((B_pad, F), dt).at[:B].set(xd)

    # Constant-index (weight / bias) blocks: single buffer saves dead VMEM.
    wb_kwargs = {}
    if single_buffer_weights:
        wb_kwargs["pipeline_mode"] = pl.Buffered(1)

    in_specs = [pl.BlockSpec((tile_b, F), lambda i: (i, 0))]
    for w in w_hidden:
        in_specs.append(pl.BlockSpec(w.shape, lambda i: (0, 0), **wb_kwargs))
    in_specs.append(pl.BlockSpec(w_head.shape, lambda i: (0, 0), **wb_kwargs))
    in_specs.append(pl.BlockSpec(b_pack.shape, lambda i: (0, 0), **wb_kwargs))
    out_spec = pl.BlockSpec((8, tile_b), lambda i: (i, 0))

    # Explicit VMEM budget (v7x: 64 MiB physical, 32 MiB default scoped).
    isz = jnp.dtype(dt).itemsize
    wbuf = 1 if single_buffer_weights else 2
    w_bytes = (sum(int(w.size) for w in w_hidden) + int(w_head.size)) * isz
    vmem_needed = (2 * tile_b * F * isz                      # x tile (dbl buf)
                   + wbuf * w_bytes                          # weights
                   + wbuf * int(b_pack.size) * 4             # packed biases
                   + 2 * 8 * tile_b * 4                      # out tile (dbl buf)
                   + 2 * tile_b * max(out_pads) * 4)         # live activations
    vmem_limit = int(min(max(4 * vmem_needed, 16 << 20), 64 << 20))

    # Scheduler hint.
    dims = [F] + list(out_pads)
    flops = 2 * B_pad * (sum(dims[i] * dims[i + 1] for i in range(n_hidden))
                         + 8 * out_pads[-1])
    bytes_accessed = (int(xd.size) * isz + w_bytes + int(b_pack.size) * 4
                      + G * 8 * tile_b * 4)
    cost = pl.CostEstimate(flops=flops, transcendentals=0,
                           bytes_accessed=bytes_accessed)

    kernel = make_deepsurv_kernel(n_hidden, out_pads, dt)

    out = pl.pallas_call(
        kernel,
        out_shape=jax.ShapeDtypeStruct((G * 8, tile_b), jnp.float32),
        grid_spec=pltpu.PrefetchScalarGridSpec(
            num_scalar_prefetch=0,
            grid=(G,),
            in_specs=in_specs,
            out_specs=out_spec,
        ),
        compiler_params=pltpu.CompilerParams(
            dimension_semantics=("parallel",),
            vmem_limit_bytes=vmem_limit),
        cost_estimate=cost,
    )(xd, *w_hidden, w_head, b_pack)

    # Row 0 of every (8, tile_b) tile holds the real head outputs.
    risk = out.reshape(G, 8, tile_b)[:, 0, :].reshape(B_pad)[:B]
    return risk.reshape(B, 1)


# ----------------------------------------------------------------------------
# Plain-JAX reference (unfused, original BN form) for correctness checking
# ----------------------------------------------------------------------------
def deepsurv_reference(x, params):
    h = x
    for lp in params["hidden"]:
        h = h @ lp["w"] + lp["b"]
        h = jnp.maximum(h, 0.0)
        h = (h - lp["mean"]) * jax.lax.rsqrt(lp["var"] + EPS) * lp["gamma"] + lp["beta"]
    return h @ params["out"]["w"] + params["out"]["b"]


if __name__ == "__main__":
    key = jax.random.PRNGKey(0)
    B, F = 256, 16
    hidden_layers = [32, 64]

    key, kx, kp = jax.random.split(key, 3)
    x = jax.random.normal(kx, (B, F), jnp.float32)
    params = init_params(kp, F, hidden_layers, randomize_bn=True)
    ref = deepsurv_reference(x, params)

    # One-time parameter prep (BN fold + padding + packing), reused per call.
    prep_f32 = prepare_params(params, compute_dtype=jnp.float32)
    prep_bf16 = prepare_params(params, compute_dtype=jnp.bfloat16)

    # f32 path: exact-tolerance check. Fall back to double-buffered weights if
    # this JAX build does not support pipeline_mode=pl.Buffered on BlockSpec.
    single_buf = True
    try:
        out32 = jax.block_until_ready(
            deepsurv_forward(x, prep_f32, single_buffer_weights=True))
    except Exception:
        single_buf = False
        out32 = jax.block_until_ready(
            deepsurv_forward(x, prep_f32, single_buffer_weights=False))
    assert out32.shape == (B, 1), out32.shape
    assert jnp.allclose(out32, ref, atol=1e-4, rtol=1e-4), \
        float(jnp.max(jnp.abs(out32 - ref)))

    # bf16 storage path (default): widened tolerance vs. the f32 reference.
    out16 = jax.block_until_ready(
        deepsurv_forward(x, prep_bf16, single_buffer_weights=single_buf))
    assert out16.shape == (B, 1), out16.shape
    assert jnp.allclose(out16, ref, atol=5e-2, rtol=5e-2), \
        float(jnp.max(jnp.abs(out16 - ref)))

    print("KERNEL_OK")
</pallas_src>

<mosaic_0001>
module attributes {stable_mosaic.version = 11 : i64} {
  func.func @kernel(%arg0: i32, %arg1: memref<256x16xf32, #tpu.memory_space<vmem>>, %arg2: memref<16x128xf32, #tpu.memory_space<vmem>>, %arg3: memref<128x128xf32, #tpu.memory_space<vmem>>, %arg4: memref<8x128xf32, #tpu.memory_space<vmem>>, %arg5: memref<3x128xf32, #tpu.memory_space<vmem>>, %arg6: memref<8x256xf32, #tpu.memory_space<vmem>>) attributes {dimension_semantics = [#tpu.dimension_semantics<parallel>], iteration_bounds = array<i64: 1>, scalar_prefetch = 0 : i64, scratch_operands = 0 : i64, tpu.core_type = #tpu.core_type<tc>, window_params = [{transform_indices = @transform_0, window_bounds = array<i64: 256, 16>}, {pipeline_mode = #tpu.pipeline_mode<synchronous>, transform_indices = @transform_1, window_bounds = array<i64: 16, 128>}, {pipeline_mode = #tpu.pipeline_mode<synchronous>, transform_indices = @transform_2, window_bounds = array<i64: 128, 128>}, {pipeline_mode = #tpu.pipeline_mode<synchronous>, transform_indices = @transform_3, window_bounds = array<i64: 8, 128>}, {pipeline_mode = #tpu.pipeline_mode<synchronous>, transform_indices = @transform_4, window_bounds = array<i64: 3, 128>}, {transform_indices = @transform_5, window_bounds = array<i64: 8, 256>}]} {
    %c0 = arith.constant 0 : index
    %c0_0 = arith.constant 0 : index
    %0 = vector.load %arg1[%c0, %c0_0] : memref<256x16xf32, #tpu.memory_space<vmem>>, vector<256x16xf32>
    %c0_1 = arith.constant 0 : index
    %c0_2 = arith.constant 0 : index
    %1 = vector.load %arg5[%c0_1, %c0_2] : memref<3x128xf32, #tpu.memory_space<vmem>>, vector<1x128xf32>
    %c0_3 = arith.constant 0 : index
    %c0_4 = arith.constant 0 : index
    %2 = vector.load %arg2[%c0_3, %c0_4] : memref<16x128xf32, #tpu.memory_space<vmem>>, vector<16x128xf32>
    %cst = arith.constant dense<0.000000e+00> : vector<256x128xf32>
    %3 = tpu.matmul %0, %2, %cst {dimension_numbers = #tpu.dot_dimension_numbers<[1], [0], [0], [1], [0, 0, 1, 1], [], []>} : vector<256x16xf32>, vector<16x128xf32>, vector<256x128xf32> -> vector<256x128xf32>
    %4 = vector.broadcast %1 : vector<1x128xf32> to vector<256x128xf32>
    %5 = arith.addf %3, %4 : vector<256x128xf32>
    %cst_5 = arith.constant 0.000000e+00 : f32
    %6 = vector.broadcast %cst_5 : f32 to vector<256x128xf32>
    %7 = arith.maximumf %5, %6 : vector<256x128xf32>
    %c1 = arith.constant 1 : index
    %c0_6 = arith.constant 0 : index
    %8 = vector.load %arg5[%c1, %c0_6] : memref<3x128xf32, #tpu.memory_space<vmem>>, vector<1x128xf32>
    %c0_7 = arith.constant 0 : index
    %c0_8 = arith.constant 0 : index
    %9 = vector.load %arg3[%c0_7, %c0_8] : memref<128x128xf32, #tpu.memory_space<vmem>>, vector<128x128xf32>
    %cst_9 = arith.constant dense<0.000000e+00> : vector<256x128xf32>
    %10 = tpu.matmul %7, %9, %cst_9 {dimension_numbers = #tpu.dot_dimension_numbers<[1], [0], [0], [1], [0, 0, 1, 1], [], []>} : vector<256x128xf32>, vector<128x128xf32>, vector<256x128xf32> -> vector<256x128xf32>
    %11 = vector.broadcast %8 : vector<1x128xf32> to vector<256x128xf32>
    %12 = arith.addf %10, %11 : vector<256x128xf32>
    %cst_10 = arith.constant 0.000000e+00 : f32
    %13 = vector.broadcast %cst_10 : f32 to vector<256x128xf32>
    %14 = arith.maximumf %12, %13 : vector<256x128xf32>
    %c0_11 = arith.constant 0 : index
    %c0_12 = arith.constant 0 : index
    %15 = vector.load %arg4[%c0_11, %c0_12] : memref<8x128xf32, #tpu.memory_space<vmem>>, vector<8x128xf32>
    %cst_13 = arith.constant dense<0.000000e+00> : vector<8x256xf32>
    %16 = tpu.matmul %15, %14, %cst_13 {dimension_numbers = #tpu.dot_dimension_numbers<[1], [1], [0], [0], [0, 0, 1, 0], [], []>} : vector<8x128xf32>, vector<256x128xf32>, vector<8x256xf32> -> vector<8x256xf32>
    %c2 = arith.constant 2 : index
    %c0_14 = arith.constant 0 : index
    %17 = vector.load %arg5[%c2, %c0_14] : memref<3x128xf32, #tpu.memory_space<vmem>>, vector<1x1xf32>
    %18 = vector.broadcast %17 : vector<1x1xf32> to vector<8x256xf32>
    %19 = arith.addf %16, %18 : vector<8x256xf32>
    %c0_15 = arith.constant 0 : index
    %c0_16 = arith.constant 0 : index
    %20 = vector.load %arg6[%c0_15, %c0_16] : memref<8x256xf32, #tpu.memory_space<vmem>>, vector<8x256xf32>
    tpu.vector_store %arg6[%c0_15, %c0_16], %19 {strides = array<i32>} : memref<8x256xf32, #tpu.memory_space<vmem>>, vector<8x256xf32>,
    return
  }
  func.func @transform_0(%arg0: i32) -> (i32, i32) {
    %c0_i32 = arith.constant 0 : i32
    %c0_i32_0 = arith.constant 0 : i32
    return %arg0, %c0_i32 : i32, i32
  }
  func.func @transform_1(%arg0: i32) -> (i32, i32) {
    %c0_i32 = arith.constant 0 : i32
    %c0_i32_0 = arith.constant 0 : i32
    %c0_i32_1 = arith.constant 0 : i32
    return %c0_i32, %c0_i32_0 : i32, i32
  }
  func.func @transform_2(%arg0: i32) -> (i32, i32) {
    %c0_i32 = arith.constant 0 : i32
    %c0_i32_0 = arith.constant 0 : i32
    %c0_i32_1 = arith.constant 0 : i32
    return %c0_i32, %c0_i32_0 : i32, i32
  }
  func.func @transform_3(%arg0: i32) -> (i32, i32) {
    %c0_i32 = arith.constant 0 : i32
    %c0_i32_0 = arith.constant 0 : i32
    %c0_i32_1 = arith.constant 0 : i32
    return %c0_i32, %c0_i32_0 : i32, i32
  }
  func.func @transform_4(%arg0: i32) -> (i32, i32) {
    %c0_i32 = arith.constant 0 : i32
    %c0_i32_0 = arith.constant 0 : i32
    %c0_i32_1 = arith.constant 0 : i32
    return %c0_i32, %c0_i32_0 : i32, i32
  }
  func.func @transform_5(%arg0: i32) -> (i32, i32) {
    %c0_i32 = arith.constant 0 : i32
    %c0_i32_0 = arith.constant 0 : i32
    return %arg0, %c0_i32 : i32, i32
  }
}

module attributes {stable_mosaic.version = 11 : i64} {
  func.func @kernel(%arg0: i32, %arg1: memref<256x16xf32, #tpu.memory_space<vmem>>, %arg2: memref<16x128xf32, #tpu.memory_space<vmem>>, %arg3: memref<128x128xf32, #tpu.memory_space<vmem>>, %arg4: memref<8x128xf32, #tpu.memory_space<vmem>>, %arg5: memref<3x128xf32, #tpu.memory_space<vmem>>, %arg6: memref<8x256xf32, #tpu.memory_space<vmem>>) attributes {dimension_semantics = [#tpu.dimension_semantics<parallel>], iteration_bounds = array<i64: 1>, scalar_prefetch = 0 : i64, scratch_operands = 0 : i64, tpu.core_type = #tpu.core_type<tc>, window_params = [{transform_indices = @transform_0, window_bounds = array<i64: 256, 16>}, {pipeline_mode = #tpu.pipeline_mode<synchronous>, transform_indices = @transform_1, window_bounds = array<i64: 16, 128>}, {pipeline_mode = #tpu.pipeline_mode<synchronous>, transform_indices = @transform_2, window_bounds = array<i64: 128, 128>}, {pipeline_mode = #tpu.pipeline_mode<synchronous>, transform_indices = @transform_3, window_bounds = array<i64: 8, 128>}, {pipeline_mode = #tpu.pipeline_mode<synchronous>, transform_indices = @transform_4, window_bounds = array<i64: 3, 128>}, {transform_indices = @transform_5, window_bounds = array<i64: 8, 256>}]} {
    %c0 = arith.constant 0 : index
    %c0_0 = arith.constant 0 : index
    %0 = vector.load %arg1[%c0, %c0_0] : memref<256x16xf32, #tpu.memory_space<vmem>>, vector<256x16xf32>
    %c0_1 = arith.constant 0 : index
    %c0_2 = arith.constant 0 : index
    %1 = vector.load %arg5[%c0_1, %c0_2] : memref<3x128xf32, #tpu.memory_space<vmem>>, vector<1x128xf32>
    %c0_3 = arith.constant 0 : index
    %c0_4 = arith.constant 0 : index
    %2 = vector.load %arg2[%c0_3, %c0_4] : memref<16x128xf32, #tpu.memory_space<vmem>>, vector<16x128xf32>
    %cst = arith.constant dense<0.000000e+00> : vector<256x128xf32>
    %3 = tpu.matmul %0, %2, %cst {dimension_numbers = #tpu.dot_dimension_numbers<[1], [0], [0], [1], [0, 0, 1, 1], [], []>} : vector<256x16xf32>, vector<16x128xf32>, vector<256x128xf32> -> vector<256x128xf32>
    %4 = vector.broadcast %1 : vector<1x128xf32> to vector<256x128xf32>
    %5 = arith.addf %3, %4 : vector<256x128xf32>
    %cst_5 = arith.constant 0.000000e+00 : f32
    %6 = vector.broadcast %cst_5 : f32 to vector<256x128xf32>
    %7 = arith.maximumf %5, %6 : vector<256x128xf32>
    %c1 = arith.constant 1 : index
    %c0_6 = arith.constant 0 : index
    %8 = vector.load %arg5[%c1, %c0_6] : memref<3x128xf32, #tpu.memory_space<vmem>>, vector<1x128xf32>
    %c0_7 = arith.constant 0 : index
    %c0_8 = arith.constant 0 : index
    %9 = vector.load %arg3[%c0_7, %c0_8] : memref<128x128xf32, #tpu.memory_space<vmem>>, vector<128x128xf32>
    %cst_9 = arith.constant dense<0.000000e+00> : vector<256x128xf32>
    %10 = tpu.matmul %7, %9, %cst_9 {dimension_numbers = #tpu.dot_dimension_numbers<[1], [0], [0], [1], [0, 0, 1, 1], [], []>} : vector<256x128xf32>, vector<128x128xf32>, vector<256x128xf32> -> vector<256x128xf32>
    %11 = vector.broadcast %8 : vector<1x128xf32> to vector<256x128xf32>
    %12 = arith.addf %10, %11 : vector<256x128xf32>
    %cst_10 = arith.constant 0.000000e+00 : f32
    %13 = vector.broadcast %cst_10 : f32 to vector<256x128xf32>
    %14 = arith.maximumf %12, %13 : vector<256x128xf32>
    %c0_11 = arith.constant 0 : index
    %c0_12 = arith.constant 0 : index
    %15 = vector.load %arg4[%c0_11, %c0_12] : memref<8x128xf32, #tpu.memory_space<vmem>>, vector<8x128xf32>
    %cst_13 = arith.constant dense<0.000000e+00> : vector<8x256xf32>
    %16 = tpu.matmul %15, %14, %cst_13 {dimension_numbers = #tpu.dot_dimension_numbers<[1], [1], [0], [0], [0, 0, 1, 0], [], []>} : vector<8x128xf32>, vector<256x128xf32>, vector<8x256xf32> -> vector<8x256xf32>
    %c2 = arith.constant 2 : index
    %c0_14 = arith.constant 0 : index
    %17 = vector.load %arg5[%c2, %c0_14] : memref<3x128xf32, #tpu.memory_space<vmem>>, vector<1x1xf32>
    %18 = vector.broadcast %17 : vector<1x1xf32> to vector<8x256xf32>
    %19 = arith.addf %16, %18 : vector<8x256xf32>
    %c0_15 = arith.constant 0 : index
    %c0_16 = arith.constant 0 : index
    %20 = vector.load %arg6[%c0_15, %c0_16] : memref<8x256xf32, #tpu.memory_space<vmem>>, vector<8x256xf32>
    tpu.vector_store %arg6[%c0_15, %c0_16], %19 {strides = array<i32>} : memref<8x256xf32, #tpu.memory_space<vmem>>, vector<8x256xf32>,
    return
  }
  func.func @transform_0(%arg0: i32) -> (i32, i32) {
    %c0_i32 = arith.constant 0 : i32
    %c0_i32_0 = arith.constant 0 : i32
    return %arg0, %c0_i32 : i32, i32
  }
  func.func @transform_1(%arg0: i32) -> (i32, i32) {
    %c0_i32 = arith.constant 0 : i32
    %c0_i32_0 = arith.constant 0 : i32
    %c0_i32_1 = arith.constant 0 : i32
    return %c0_i32, %c0_i32_0 : i32, i32
  }
  func.func @transform_2(%arg0: i32) -> (i32, i32) {
    %c0_i32 = arith.constant 0 : i32
    %c0_i32_0 = arith.constant 0 : i32
    %c0_i32_1 = arith.constant 0 : i32
    return %c0_i32, %c0_i32_0 : i32, i32
  }
  func.func @transform_3(%arg0: i32) -> (i32, i32) {
    %c0_i32 = arith.constant 0 : i32
    %c0_i32_0 = arith.constant 0 : i32
    %c0_i32_1 = arith.constant 0 : i32
    return %c0_i32, %c0_i32_0 : i32, i32
  }
  func.func @transform_4(%arg0: i32) -> (i32, i32) {
    %c0_i32 = arith.constant 0 : i32
    %c0_i32_0 = arith.constant 0 : i32
    %c0_i32_1 = arith.constant 0 : i32
    return %c0_i32, %c0_i32_0 : i32, i32
  }
  func.func @transform_5(%arg0: i32) -> (i32, i32) {
    %c0_i32 = arith.constant 0 : i32
    %c0_i32_0 = arith.constant 0 : i32
    return %arg0, %c0_i32 : i32, i32
  }
}

</mosaic_0001>

<llo_original>
// kernel: tpu_custom_call.1
$region0: #{tpu_custom_call.1}
  #allocation0 [shape = 'u32[]', space=smem, size = 0x4, offset = 0x4, fixed_abs, tag = 'smem constant byte address 0x4 - core index']
  #allocation1 [shape = 'u32[72,128]{1,0:T(1,128)}', space=vmem, size = 0x9000, scoped, tag = 'internal scratch']
  %s0 = inlined_call_operand.vmem [shape: f32[256,16], index: 0, kind: input, shape index: {}]
  %s1 = inlined_call_operand.vmem [shape: f32[16,128], index: 1, kind: input, shape index: {}]
  %s2 = inlined_call_operand.vmem [shape: f32[128,128], index: 2, kind: input, shape index: {}]
  %s3 = inlined_call_operand.vmem [shape: f32[8,128], index: 3, kind: input, shape index: {}]
  %s4 = inlined_call_operand.vmem [shape: f32[3,128], index: 4, kind: input, shape index: {}]
  %s5 = inlined_call_operand.hbm [shape: f32[8,256], index: 5, kind: output, shape index: {}]
  %s6 = sld [smem:[#allocation0]]
  $region30: #{tpu_custom_call.1} parent=0
    _
  %s8 = ssub.s32 1, %s6
  %s9 = scalar_select 0, %s8, %s6
  $region1: #{tpu_custom_call.1} parent=0
    #allocation2 [shape = 'u8[8192]{0}', space=vmem, size = 0x2000, scoped, tag = 'output window, operand 0, single buffered']
    #allocation3 [shape = 's32[1]{0}', space=sflag, size = 0x4, scoped, tag = 'scoped memory for tpu_custom_call.1']
    %10 = vsyncpa [#allocation3], 0
    // Predicated region
    $region2: #{tpu_custom_call.1} parent=1 // pred_check
      _
    $region3: #{tpu_custom_call.1} parent=1 // pred_check_branch
      %12 = sbr.rel (0) target = $region5
    $region4: #{tpu_custom_call.1} parent=1 // pred_region
      _
    $region5: #{tpu_custom_call.1} parent=1 // pred_fallthru
      _
    // Predicated region
    $region6: #{tpu_custom_call.1} parent=1 // pred_check
      _
    $region7: #{tpu_custom_call.1} parent=1 // pred_check_branch
      %14 = sbr.rel (0) target = $region9
    $region8: #{tpu_custom_call.1} parent=1 // pred_region
      _
    $region9: #{tpu_custom_call.1} parent=1 // pred_fallthru
      _
    // Predicated region
    $region10: #{tpu_custom_call.1} parent=1 // pred_check
      _
    $region11: #{tpu_custom_call.1} parent=1 // pred_check_branch
      %16 = sbr.rel (0) target = $region13
    $region12: #{tpu_custom_call.1} parent=1 // pred_region
      _
    $region13: #{tpu_custom_call.1} parent=1 // pred_fallthru
      _
    // Predicated region
    $region14: #{tpu_custom_call.1} parent=1 // pred_check
      _
    $region15: #{tpu_custom_call.1} parent=1 // pred_check_branch
      %18 = sbr.rel (0) target = $region17
    $region16: #{tpu_custom_call.1} parent=1 // pred_region
      _
    $region17: #{tpu_custom_call.1} parent=1 // pred_fallthru
      _
    // Predicated region
    $region18: #{tpu_custom_call.1} parent=1 // pred_check
      _
    $region19: #{tpu_custom_call.1} parent=1 // pred_check_branch
      %20 = sbr.rel (0) target = $region21
    $region20: #{tpu_custom_call.1} parent=1 // pred_region
      _
    $region21: #{tpu_custom_call.1} parent=1 // pred_fallthru
      _
    %v21 = vld [vmem:[%s0] sm:$0xff]
    %v22 = vld [vmem:[%s0 + $0x8] sm:$0xff]
    %v23 = vld [vmem:[%s0 + $0x10] sm:$0xff]
    %v24 = vld [vmem:[%s0 + $0x18] sm:$0xff]
    %v25 = vld [vmem:[%s0 + $0x20] sm:$0xff]
    %v26 = vld [vmem:[%s0 + $0x28] sm:$0xff]
    %v27 = vld [vmem:[%s0 + $0x30] sm:$0xff]
    %v28 = vld [vmem:[%s0 + $0x38] sm:$0xff]
    %v29 = vld [vmem:[%s0 + $0x40] sm:$0xff]
    %v30 = vld [vmem:[%s0 + $0x48] sm:$0xff]
    %v31 = vld [vmem:[%s0 + $0x50] sm:$0xff]
    %v32 = vld [vmem:[%s0 + $0x58] sm:$0xff]
    %v33 = vld [vmem:[%s0 + $0x60] sm:$0xff]
    %v34 = vld [vmem:[%s0 + $0x68] sm:$0xff]
    %v35 = vld [vmem:[%s0 + $0x70] sm:$0xff]
    %v36 = vld [vmem:[%s0 + $0x78] sm:$0xff]
    %v37 = vld [vmem:[%s0 + $0x80] sm:$0xff]
    %v38 = vld [vmem:[%s0 + $0x88] sm:$0xff]
    %v39 = vld [vmem:[%s0 + $0x90] sm:$0xff]
    %v40 = vld [vmem:[%s0 + $0x98] sm:$0xff]
    %v41 = vld [vmem:[%s0 + $0xa0] sm:$0xff]
    %v42 = vld [vmem:[%s0 + $0xa8] sm:$0xff]
    %v43 = vld [vmem:[%s0 + $0xb0] sm:$0xff]
    %v44 = vld [vmem:[%s0 + $0xb8] sm:$0xff]
    %v45 = vld [vmem:[%s0 + $0xc0] sm:$0xff]
    %v46 = vld [vmem:[%s0 + $0xc8] sm:$0xff]
    %v47 = vld [vmem:[%s0 + $0xd0] sm:$0xff]
    %v48 = vld [vmem:[%s0 + $0xd8] sm:$0xff]
    %v49 = vld [vmem:[%s0 + $0xe0] sm:$0xff]
    %v50 = vld [vmem:[%s0 + $0xe8] sm:$0xff]
    %v51 = vld [vmem:[%s0 + $0xf0] sm:$0xff]
    %v52 = vld [vmem:[%s0 + $0xf8] sm:$0xff]
    %v53 = vld [vmem:[%s4] sm:$0x1]
    %v54 = vld [vmem:[%s1] sm:$0xff]
    %v55 = vld [vmem:[%s1 + $0x8] sm:$0xff]
    %v56 = vperm.slane %v53, 0
    %vm57 = vcmask 130048
    %v59 = vsel %vm57, %v21, 0
    %v62 = vsel %vm57, %v22, 0
    %v65 = vsel %vm57, %v23, 0
    %v68 = vsel %vm57, %v24, 0
    %v71 = vsel %vm57, %v25, 0
    %v74 = vsel %vm57, %v26, 0
    %v77 = vsel %vm57, %v27, 0
    %v80 = vsel %vm57, %v28, 0
    %v83 = vsel %vm57, %v29, 0
    %v86 = vsel %vm57, %v30, 0
    %v89 = vsel %vm57, %v31, 0
    %v92 = vsel %vm57, %v32, 0
    %v95 = vsel %vm57, %v33, 0
    %v98 = vsel %vm57, %v34, 0
    %v101 = vsel %vm57, %v35, 0
    %v104 = vsel %vm57, %v36, 0
    %v107 = vsel %vm57, %v37, 0
    %v110 = vsel %vm57, %v38, 0
    %v113 = vsel %vm57, %v39, 0
    %v116 = vsel %vm57, %v40, 0
    %v119 = vsel %vm57, %v41, 0
    %v122 = vsel %vm57, %v42, 0
    %v125 = vsel %vm57, %v43, 0
    %v128 = vsel %vm57, %v44, 0
    %v131 = vsel %vm57, %v45, 0
    %v134 = vsel %vm57, %v46, 0
    %v137 = vsel %vm57, %v47, 0
    %v140 = vsel %vm57, %v48, 0
    %v143 = vsel %vm57, %v49, 0
    %v146 = vsel %vm57, %v50, 0
    %v149 = vsel %vm57, %v51, 0
    %v152 = vsel %vm57, %v52, 0
    %154 = vmatpush.msra.mxu0 0.0
    %155 = vmatpush.msra.mxu0 0.0
    %156 = vmatpush.msra.mxu0 0.0
    %157 = vmatpush.msra.mxu0 0.0
    %158 = vmatpush.msra.mxu0 0.0
    %159 = vmatpush.msra.mxu0 0.0
    %160 = vmatpush.msra.mxu0 0.0
    %161 = vmatpush.msra.mxu0 0.0
    %162 = vmatpush.msra.mxu0 0.0
    %163 = vmatpush.msra.mxu0 0.0
    %164 = vmatpush.msra.mxu0 0.0
    %165 = vmatpush.msra.mxu0 0.0
    %166 = vmatpush.msra.mxu0 0.0
    %167 = vmatpush.msra.mxu0 0.0
    %168 = vmatpush.msra.mxu0 %v55
    %169 = vmatpush.msra.mxu0 %v54
    %170 = vmatmul.f32.gmra.mxu0 %v59
    %v171 = vpop.f32.mrf.mxu0
    %v172 = vadd.f32 %v56, %v171
    %173 = vmatmul.f32.gmra.mxu0 %v62
    %v174 = vpop.f32.mrf.mxu0
    %v175 = vadd.f32 %v56, %v174
    %176 = vmatmul.f32.gmra.mxu0 %v65
    %v177 = vpop.f32.mrf.mxu0
    %v178 = vadd.f32 %v56, %v177
    %179 = vmatmul.f32.gmra.mxu0 %v68
    %v180 = vpop.f32.mrf.mxu0
    %v181 = vadd.f32 %v56, %v180
    %182 = vmatmul.f32.gmra.mxu0 %v71
    %v183 = vpop.f32.mrf.mxu0
    %v184 = vadd.f32 %v56, %v183
    %185 = vmatmul.f32.gmra.mxu0 %v74
    %v186 = vpop.f32.mrf.mxu0
    %v187 = vadd.f32 %v56, %v186
    %188 = vmatmul.f32.gmra.mxu0 %v77
    %v189 = vpop.f32.mrf.mxu0
    %v190 = vadd.f32 %v56, %v189
    %191 = vmatmul.f32.gmra.mxu0 %v80
    %v192 = vpop.f32.mrf.mxu0
    %v193 = vadd.f32 %v56, %v192
    %194 = vmatmul.f32.gmra.mxu0 %v83
    %v195 = vpop.f32.mrf.mxu0
    %v196 = vadd.f32 %v56, %v195
    %197 = vmatmul.f32.gmra.mxu0 %v86
    %v198 = vpop.f32.mrf.mxu0
    %v199 = vadd.f32 %v56, %v198
    %200 = vmatmul.f32.gmra.mxu0 %v89
    %v201 = vpop.f32.mrf.mxu0
    %v202 = vadd.f32 %v56, %v201
    %203 = vmatmul.f32.gmra.mxu0 %v92
    %v204 = vpop.f32.mrf.mxu0
    %v205 = vadd.f32 %v56, %v204
    %206 = vmatmul.f32.gmra.mxu0 %v95
    %v207 = vpop.f32.mrf.mxu0
    %v208 = vadd.f32 %v56, %v207
    %209 = vmatmul.f32.gmra.mxu0 %v98
    %v210 = vpop.f32.mrf.mxu0
    %v211 = vadd.f32 %v56, %v210
    %212 = vmatmul.f32.gmra.mxu0 %v101
    %v213 = vpop.f32.mrf.mxu0
    %v214 = vadd.f32 %v56, %v213
    %215 = vmatmul.f32.gmra.mxu0 %v104
    %v216 = vpop.f32.mrf.mxu0
    %v217 = vadd.f32 %v56, %v216
    %218 = vmatmul.f32.gmra.mxu0 %v107
    %v219 = vpop.f32.mrf.mxu0
    %v220 = vadd.f32 %v56, %v219
    %221 = vmatmul.f32.gmra.mxu0 %v110
    %v222 = vpop.f32.mrf.mxu0
    %v223 = vadd.f32 %v56, %v222
    %224 = vmatmul.f32.gmra.mxu0 %v113
    %v225 = vpop.f32.mrf.mxu0
    %v226 = vadd.f32 %v56, %v225
    %227 = vmatmul.f32.gmra.mxu0 %v116
    %v228 = vpop.f32.mrf.mxu0
    %v229 = vadd.f32 %v56, %v228
    %230 = vmatmul.f32.gmra.mxu0 %v119
    %v231 = vpop.f32.mrf.mxu0
    %v232 = vadd.f32 %v56, %v231
    %233 = vmatmul.f32.gmra.mxu0 %v122
    %v234 = vpop.f32.mrf.mxu0
    %v235 = vadd.f32 %v56, %v234
    %236 = vmatmul.f32.gmra.mxu0 %v125
    %v237 = vpop.f32.mrf.mxu0
    %v238 = vadd.f32 %v56, %v237
    %239 = vmatmul.f32.gmra.mxu0 %v128
    %v240 = vpop.f32.mrf.mxu0
    %v241 = vadd.f32 %v56, %v240
    %242 = vmatmul.f32.gmra.mxu0 %v131
    %v243 = vpop.f32.mrf.mxu0
    %v244 = vadd.f32 %v56, %v243
    %245 = vmatmul.f32.gmra.mxu0 %v134
    %v246 = vpop.f32.mrf.mxu0
    %v247 = vadd.f32 %v56, %v246
    %248 = vmatmul.f32.gmra.mxu0 %v137
    %v249 = vpop.f32.mrf.mxu0
    %v250 = vadd.f32 %v56, %v249
    %251 = vmatmul.f32.gmra.mxu0 %v140
    %v252 = vpop.f32.mrf.mxu0
    %v253 = vadd.f32 %v56, %v252
    %254 = vmatmul.f32.gmra.mxu0 %v143
    %v255 = vpop.f32.mrf.mxu0
    %v256 = vadd.f32 %v56, %v255
    %257 = vmatmul.f32.gmra.mxu0 %v146
    %v258 = vpop.f32.mrf.mxu0
    %v259 = vadd.f32 %v56, %v258
    %260 = vmatmul.f32.gmra.mxu0 %v149
    %v261 = vpop.f32.mrf.mxu0
    %v262 = vadd.f32 %v56, %v261
    %263 = vmatmul.f32.gmra.mxu0 %v152
    %v264 = vpop.f32.mrf.mxu0
    %v265 = vadd.f32 %v56, %v264
    %266 = vdwg.mxu0
    %v267 = vmax.f32 %v172, 0.0
    %v268 = vmax.f32 %v175, 0.0
    %v269 = vmax.f32 %v178, 0.0
    %v270 = vmax.f32 %v181, 0.0
    %v271 = vmax.f32 %v184, 0.0
    %v272 = vmax.f32 %v187, 0.0
    %v273 = vmax.f32 %v190, 0.0
    %v274 = vmax.f32 %v193, 0.0
    %v275 = vmax.f32 %v196, 0.0
    %v276 = vmax.f32 %v199, 0.0
    %v277 = vmax.f32 %v202, 0.0
    %v278 = vmax.f32 %v205, 0.0
    %v279 = vmax.f32 %v208, 0.0
    %v280 = vmax.f32 %v211, 0.0
    %v281 = vmax.f32 %v214, 0.0
    %v282 = vmax.f32 %v217, 0.0
    %v283 = vmax.f32 %v220, 0.0
    %v284 = vmax.f32 %v223, 0.0
    %v285 = vmax.f32 %v226, 0.0
    %v286 = vmax.f32 %v229, 0.0
    %v287 = vmax.f32 %v232, 0.0
    %v288 = vmax.f32 %v235, 0.0
    %v289 = vmax.f32 %v238, 0.0
    %v290 = vmax.f32 %v241, 0.0
    %v291 = vmax.f32 %v244, 0.0
    %v292 = vmax.f32 %v247, 0.0
    %v293 = vmax.f32 %v250, 0.0
    %v294 = vmax.f32 %v253, 0.0
    %v295 = vmax.f32 %v256, 0.0
    %v296 = vmax.f32 %v259, 0.0
    %v297 = vmax.f32 %v262, 0.0
    %v298 = vmax.f32 %v265, 0.0
    %v299 = vld [vmem:[%s4 + $0x1] sm:$0x1]
    %v300 = vld [vmem:[%s2] sm:$0xff]
    %v301 = vld [vmem:[%s2 + $0x8] sm:$0xff]
    %v302 = vld [vmem:[%s2 + $0x10] sm:$0xff]
    %v303 = vld [vmem:[%s2 + $0x18] sm:$0xff]
    %v304 = vld [vmem:[%s2 + $0x20] sm:$0xff]
    %v305 = vld [vmem:[%s2 + $0x28] sm:$0xff]
    %v306 = vld [vmem:[%s2 + $0x30] sm:$0xff]
    %v307 = vld [vmem:[%s2 + $0x38] sm:$0xff]
    %v308 = vld [vmem:[%s2 + $0x40] sm:$0xff]
    %v309 = vld [vmem:[%s2 + $0x48] sm:$0xff]
    %v310 = vld [vmem:[%s2 + $0x50] sm:$0xff]
    %v311 = vld [vmem:[%s2 + $0x58] sm:$0xff]
    %v312 = vld [vmem:[%s2 + $0x60] sm:$0xff]
    %v313 = vld [vmem:[%s2 + $0x68] sm:$0xff]
    %v314 = vld [vmem:[%s2 + $0x70] sm:$0xff]
    %v315 = vld [vmem:[%s2 + $0x78] sm:$0xff]
    %v316 = vperm.slane %v299, 0
    %317 = vmatpush.msra.mxu0 %v315
    %318 = vmatpush.msra.mxu0 %v314
    %319 = vmatpush.msra.mxu0 %v313
    %320 = vmatpush.msra.mxu0 %v312
    %321 = vmatpush.msra.mxu0 %v311
    %322 = vmatpush.msra.mxu0 %v310
    %323 = vmatpush.msra.mxu0 %v309
    %324 = vmatpush.msra.mxu0 %v308
    %325 = vmatpush.msra.mxu0 %v307
    %326 = vmatpush.msra.mxu0 %v306
    %327 = vmatpush.msra.mxu0 %v305
    %328 = vmatpush.msra.mxu0 %v304
    %329 = vmatpush.msra.mxu0 %v303
    %330 = vmatpush.msra.mxu0 %v302
    %331 = vmatpush.msra.mxu0 %v301
    %332 = vmatpush.msra.mxu0 %v300
    %333 = vmatmul.f32.gmra.mxu0 %v267
    %v334 = vpop.f32.mrf.mxu0
    %v335 = vadd.f32 %v316, %v334
    %336 = vmatmul.f32.gmra.mxu0 %v268
    %v337 = vpop.f32.mrf.mxu0
    %v338 = vadd.f32 %v316, %v337
    %339 = vmatmul.f32.gmra.mxu0 %v269
    %v340 = vpop.f32.mrf.mxu0
    %v341 = vadd.f32 %v316, %v340
    %342 = vmatmul.f32.gmra.mxu0 %v270
    %v343 = vpop.f32.mrf.mxu0
    %v344 = vadd.f32 %v316, %v343
    %345 = vmatmul.f32.gmra.mxu0 %v271
    %v346 = vpop.f32.mrf.mxu0
    %v347 = vadd.f32 %v316, %v346
    %348 = vmatmul.f32.gmra.mxu0 %v272
    %v349 = vpop.f32.mrf.mxu0
    %v350 = vadd.f32 %v316, %v349
    %351 = vmatmul.f32.gmra.mxu0 %v273
    %v352 = vpop.f32.mrf.mxu0
    %v353 = vadd.f32 %v316, %v352
    %354 = vmatmul.f32.gmra.mxu0 %v274
    %v355 = vpop.f32.mrf.mxu0
    %v356 = vadd.f32 %v316, %v355
    %357 = vmatmul.f32.gmra.mxu0 %v275
    %v358 = vpop.f32.mrf.mxu0
    %v359 = vadd.f32 %v316, %v358
    %360 = vmatmul.f32.gmra.mxu0 %v276
    %v361 = vpop.f32.mrf.mxu0
    %v362 = vadd.f32 %v316, %v361
    %363 = vmatmul.f32.gmra.mxu0 %v277
    %v364 = vpop.f32.mrf.mxu0
    %v365 = vadd.f32 %v316, %v364
    %366 = vmatmul.f32.gmra.mxu0 %v278
    %v367 = vpop.f32.mrf.mxu0
    %v368 = vadd.f32 %v316, %v367
    %369 = vmatmul.f32.gmra.mxu0 %v279
    %v370 = vpop.f32.mrf.mxu0
    %v371 = vadd.f32 %v316, %v370
    %372 = vmatmul.f32.gmra.mxu0 %v280
    %v373 = vpop.f32.mrf.mxu0
    %v374 = vadd.f32 %v316, %v373
    %375 = vmatmul.f32.gmra.mxu0 %v281
    %v376 = vpop.f32.mrf.mxu0
    %v377 = vadd.f32 %v316, %v376
    %378 = vmatmul.f32.gmra.mxu0 %v282
    %v379 = vpop.f32.mrf.mxu0
    %v380 = vadd.f32 %v316, %v379
    %381 = vmatmul.f32.gmra.mxu0 %v283
    %v382 = vpop.f32.mrf.mxu0
    %v383 = vadd.f32 %v316, %v382
    %384 = vmatmul.f32.gmra.mxu0 %v284
    %v385 = vpop.f32.mrf.mxu0
    %v386 = vadd.f32 %v316, %v385
    %387 = vmatmul.f32.gmra.mxu0 %v285
    %v388 = vpop.f32.mrf.mxu0
    %v389 = vadd.f32 %v316, %v388
    %390 = vmatmul.f32.gmra.mxu0 %v286
    %v391 = vpop.f32.mrf.mxu0
    %v392 = vadd.f32 %v316, %v391
    %393 = vmatmul.f32.gmra.mxu0 %v287
    %v394 = vpop.f32.mrf.mxu0
    %v395 = vadd.f32 %v316, %v394
    %396 = vmatmul.f32.gmra.mxu0 %v288
    %v397 = vpop.f32.mrf.mxu0
    %v398 = vadd.f32 %v316, %v397
    %399 = vmatmul.f32.gmra.mxu0 %v289
    %v400 = vpop.f32.mrf.mxu0
    %v401 = vadd.f32 %v316, %v400
    %402 = vmatmul.f32.gmra.mxu0 %v290
    %v403 = vpop.f32.mrf.mxu0
    %v404 = vadd.f32 %v316, %v403
    %405 = vmatmul.f32.gmra.mxu0 %v291
    %v406 = vpop.f32.mrf.mxu0
    %v407 = vadd.f32 %v316, %v406
    %408 = vmatmul.f32.gmra.mxu0 %v292
    %v409 = vpop.f32.mrf.mxu0
    %v410 = vadd.f32 %v316, %v409
    %411 = vmatmul.f32.gmra.mxu0 %v293
    %v412 = vpop.f32.mrf.mxu0
    %v413 = vadd.f32 %v316, %v412
    %414 = vmatmul.f32.gmra.mxu0 %v294
    %v415 = vpop.f32.mrf.mxu0
    %v416 = vadd.f32 %v316, %v415
    %417 = vmatmul.f32.gmra.mxu0 %v295
    %v418 = vpop.f32.mrf.mxu0
    %v419 = vadd.f32 %v316, %v418
    %420 = vmatmul.f32.gmra.mxu0 %v296
    %v421 = vpop.f32.mrf.mxu0
    %v422 = vadd.f32 %v316, %v421
    %423 = vmatmul.f32.gmra.mxu0 %v297
    %v424 = vpop.f32.mrf.mxu0
    %v425 = vadd.f32 %v316, %v424
    %426 = vmatmul.f32.gmra.mxu0 %v298
    %v427 = vpop.f32.mrf.mxu0
    %v428 = vadd.f32 %v316, %v427
    %429 = vdwg.mxu0
    %v430 = vmax.f32 %v335, 0.0
    %v431 = vmax.f32 %v338, 0.0
    %v432 = vmax.f32 %v341, 0.0
    %v433 = vmax.f32 %v344, 0.0
    %v434 = vmax.f32 %v347, 0.0
    %v435 = vmax.f32 %v350, 0.0
    %v436 = vmax.f32 %v353, 0.0
    %v437 = vmax.f32 %v356, 0.0
    %v438 = vmax.f32 %v359, 0.0
    %v439 = vmax.f32 %v362, 0.0
    %v440 = vmax.f32 %v365, 0.0
    %v441 = vmax.f32 %v368, 0.0
    %v442 = vmax.f32 %v371, 0.0
    %v443 = vmax.f32 %v374, 0.0
    %v444 = vmax.f32 %v377, 0.0
    %v445 = vmax.f32 %v380, 0.0
    %v446 = vmax.f32 %v383, 0.0
    %v447 = vmax.f32 %v386, 0.0
    %v448 = vmax.f32 %v389, 0.0
    %v449 = vmax.f32 %v392, 0.0
    %v450 = vmax.f32 %v395, 0.0
    %v451 = vmax.f32 %v398, 0.0
    %v452 = vmax.f32 %v401, 0.0
    %v453 = vmax.f32 %v404, 0.0
    %v454 = vmax.f32 %v407, 0.0
    %v455 = vmax.f32 %v410, 0.0
    %v456 = vmax.f32 %v413, 0.0
    %v457 = vmax.f32 %v416, 0.0
    %v458 = vmax.f32 %v419, 0.0
    %v459 = vmax.f32 %v422, 0.0
    %v460 = vmax.f32 %v425, 0.0
    %v461 = vmax.f32 %v428, 0.0
    %v462 = vld [vmem:[%s3] sm:$0xff]
    %v463 = vld [vmem:[%s4 + $0x2] sm:$0x1]
    %s465 = vtos %v463
    %v466 = vstv %s465
    %468 = vmatpush.xpose.msra.mxu0 %v445
    %469 = vmatpush.xpose.msra.mxu0 %v444
    %470 = vmatpush.xpose.msra.mxu0 %v443
    %471 = vmatpush.xpose.msra.mxu0 %v442
    %472 = vmatpush.xpose.msra.mxu0 %v441
    %473 = vmatpush.xpose.msra.mxu0 %v440
    %474 = vmatpush.xpose.msra.mxu0 %v439
    %475 = vmatpush.xpose.msra.mxu0 %v438
    %476 = vmatpush.xpose.msra.mxu0 %v437
    %477 = vmatpush.xpose.msra.mxu0 %v436
    %478 = vmatpush.xpose.msra.mxu0 %v435
    %479 = vmatpush.xpose.msra.mxu0 %v434
    %480 = vmatpush.xpose.msra.mxu0 %v433
    %481 = vmatpush.xpose.msra.mxu0 %v432
    %482 = vmatpush.xpose.msra.mxu0 %v431
    %483 = vmatpush.xpose.msra.mxu0 %v430
    %484 = vmatmul.f32.gmra.mxu0 %v462
    %v485 = vpop.f32.mrf.mxu0
    %v486 = vadd.f32 %v466, %v485
    %487 = vdwg.mxu0
    %488 = vmatpush.xpose.msra.mxu0 %v461
    %489 = vmatpush.xpose.msra.mxu0 %v460
    %490 = vmatpush.xpose.msra.mxu0 %v459
    %491 = vmatpush.xpose.msra.mxu0 %v458
    %492 = vmatpush.xpose.msra.mxu0 %v457
    %493 = vmatpush.xpose.msra.mxu0 %v456
    %494 = vmatpush.xpose.msra.mxu0 %v455
    %495 = vmatpush.xpose.msra.mxu0 %v454
    %496 = vmatpush.xpose.msra.mxu0 %v453
    %497 = vmatpush.xpose.msra.mxu0 %v452
    %498 = vmatpush.xpose.msra.mxu0 %v451
    %499 = vmatpush.xpose.msra.mxu0 %v450
    %500 = vmatpush.xpose.msra.mxu0 %v449
    %501 = vmatpush.xpose.msra.mxu0 %v448
    %502 = vmatpush.xpose.msra.mxu0 %v447
    %503 = vmatpush.xpose.msra.mxu0 %v446
    %504 = vmatmul.f32.gmra.mxu0 %v462
    %v505 = vpop.f32.mrf.mxu0
    %v506 = vadd.f32 %v466, %v505
    %507 = vdwg.mxu0
    %508 = vst [vmem:[#allocation2] sm:$0xff] %v486
    %509 = vst [vmem:[#allocation2 + $0x8] sm:$0xff] %v506
    // Predicated region
    $region22: #{tpu_custom_call.1} parent=1 // pred_check
      _
    $region23: #{tpu_custom_call.1} parent=1 // pred_check_branch
      %511 = sbr.rel (0) target = $region25
    $region24: #{tpu_custom_call.1} parent=1 // pred_region
      %513 = vsyncadd [#allocation3], 0
      %s515 = sshll.u32 [#allocation2], 4
      %s516 = int_to_ptr.vmem [resolvable:$true] %s515
      %s517 = sshll.u32 %s5, 4
      %s518 = int_to_ptr.hbm [resolvable:$true] %s517
      %520 = dma.vmem_to_hbm [thread:$0]  %s516, 256, %s518, [#allocation3]
    $region25: #{tpu_custom_call.1} parent=1 // pred_fallthru
      _
    // Predicated region
    $region26: #{tpu_custom_call.1} parent=1 // pred_check
      _
    $region27: #{tpu_custom_call.1} parent=1 // pred_check_branch
      %522 = sbr.rel (0) target = $region29
    $region28: #{tpu_custom_call.1} parent=1 // pred_region
      %524 = dma.done [#allocation3], 256
    $region29: #{tpu_custom_call.1} parent=1 // pred_fallthru
      _
    %525 = vsyncpa [#allocation3], 1

// kernel: tpu_custom_call.1
$region0: #{tpu_custom_call.1}
  #allocation0 [shape = 'u32[]', space=smem, size = 0x4, offset = 0x4, fixed_abs, tag = 'smem constant byte address 0x4 - core index']
  #allocation1 [shape = 'u32[72,128]{1,0:T(1,128)}', space=vmem, size = 0x9000, scoped, tag = 'internal scratch']
  %s0 = inlined_call_operand.vmem [shape: f32[256,16], index: 0, kind: input, shape index: {}]
  %s1 = inlined_call_operand.vmem [shape: f32[16,128], index: 1, kind: input, shape index: {}]
  %s2 = inlined_call_operand.vmem [shape: f32[128,128], index: 2, kind: input, shape index: {}]
  %s3 = inlined_call_operand.vmem [shape: f32[8,128], index: 3, kind: input, shape index: {}]
  %s4 = inlined_call_operand.vmem [shape: f32[3,128], index: 4, kind: input, shape index: {}]
  %s5 = inlined_call_operand.hbm [shape: f32[8,256], index: 5, kind: output, shape index: {}]
  %s6 = sld [smem:[#allocation0]]
  $region30: #{tpu_custom_call.1} parent=0
    _
  %s8 = ssub.s32 1, %s6
  %s9 = scalar_select 0, %s8, %s6
  $region1: #{tpu_custom_call.1} parent=0
    #allocation2 [shape = 'u8[8192]{0}', space=vmem, size = 0x2000, scoped, tag = 'output window, operand 0, single buffered']
    #allocation3 [shape = 's32[1]{0}', space=sflag, size = 0x4, scoped, tag = 'scoped memory for tpu_custom_call.1']
    %10 = vsyncpa [#allocation3], 0
    // Predicated region
    $region2: #{tpu_custom_call.1} parent=1 // pred_check
      _
    $region3: #{tpu_custom_call.1} parent=1 // pred_check_branch
      %12 = sbr.rel (0) target = $region5
    $region4: #{tpu_custom_call.1} parent=1 // pred_region
      _
    $region5: #{tpu_custom_call.1} parent=1 // pred_fallthru
      _
    // Predicated region
    $region6: #{tpu_custom_call.1} parent=1 // pred_check
      _
    $region7: #{tpu_custom_call.1} parent=1 // pred_check_branch
      %14 = sbr.rel (0) target = $region9
    $region8: #{tpu_custom_call.1} parent=1 // pred_region
      _
    $region9: #{tpu_custom_call.1} parent=1 // pred_fallthru
      _
    // Predicated region
    $region10: #{tpu_custom_call.1} parent=1 // pred_check
      _
    $region11: #{tpu_custom_call.1} parent=1 // pred_check_branch
      %16 = sbr.rel (0) target = $region13
    $region12: #{tpu_custom_call.1} parent=1 // pred_region
      _
    $region13: #{tpu_custom_call.1} parent=1 // pred_fallthru
      _
    // Predicated region
    $region14: #{tpu_custom_call.1} parent=1 // pred_check
      _
    $region15: #{tpu_custom_call.1} parent=1 // pred_check_branch
      %18 = sbr.rel (0) target = $region17
    $region16: #{tpu_custom_call.1} parent=1 // pred_region
      _
    $region17: #{tpu_custom_call.1} parent=1 // pred_fallthru
      _
    // Predicated region
    $region18: #{tpu_custom_call.1} parent=1 // pred_check
      _
    $region19: #{tpu_custom_call.1} parent=1 // pred_check_branch
      %20 = sbr.rel (0) target = $region21
    $region20: #{tpu_custom_call.1} parent=1 // pred_region
      _
    $region21: #{tpu_custom_call.1} parent=1 // pred_fallthru
      _
    %v21 = vld [vmem:[%s0] sm:$0xff]
    %v22 = vld [vmem:[%s0 + $0x8] sm:$0xff]
    %v23 = vld [vmem:[%s0 + $0x10] sm:$0xff]
    %v24 = vld [vmem:[%s0 + $0x18] sm:$0xff]
    %v25 = vld [vmem:[%s0 + $0x20] sm:$0xff]
    %v26 = vld [vmem:[%s0 + $0x28] sm:$0xff]
    %v27 = vld [vmem:[%s0 + $0x30] sm:$0xff]
    %v28 = vld [vmem:[%s0 + $0x38] sm:$0xff]
    %v29 = vld [vmem:[%s0 + $0x40] sm:$0xff]
    %v30 = vld [vmem:[%s0 + $0x48] sm:$0xff]
    %v31 = vld [vmem:[%s0 + $0x50] sm:$0xff]
    %v32 = vld [vmem:[%s0 + $0x58] sm:$0xff]
    %v33 = vld [vmem:[%s0 + $0x60] sm:$0xff]
    %v34 = vld [vmem:[%s0 + $0x68] sm:$0xff]
    %v35 = vld [vmem:[%s0 + $0x70] sm:$0xff]
    %v36 = vld [vmem:[%s0 + $0x78] sm:$0xff]
    %v37 = vld [vmem:[%s0 + $0x80] sm:$0xff]
    %v38 = vld [vmem:[%s0 + $0x88] sm:$0xff]
    %v39 = vld [vmem:[%s0 + $0x90] sm:$0xff]
    %v40 = vld [vmem:[%s0 + $0x98] sm:$0xff]
    %v41 = vld [vmem:[%s0 + $0xa0] sm:$0xff]
    %v42 = vld [vmem:[%s0 + $0xa8] sm:$0xff]
    %v43 = vld [vmem:[%s0 + $0xb0] sm:$0xff]
    %v44 = vld [vmem:[%s0 + $0xb8] sm:$0xff]
    %v45 = vld [vmem:[%s0 + $0xc0] sm:$0xff]
    %v46 = vld [vmem:[%s0 + $0xc8] sm:$0xff]
    %v47 = vld [vmem:[%s0 + $0xd0] sm:$0xff]
    %v48 = vld [vmem:[%s0 + $0xd8] sm:$0xff]
    %v49 = vld [vmem:[%s0 + $0xe0] sm:$0xff]
    %v50 = vld [vmem:[%s0 + $0xe8] sm:$0xff]
    %v51 = vld [vmem:[%s0 + $0xf0] sm:$0xff]
    %v52 = vld [vmem:[%s0 + $0xf8] sm:$0xff]
    %v53 = vld [vmem:[%s4] sm:$0x1]
    %v54 = vld [vmem:[%s1] sm:$0xff]
    %v55 = vld [vmem:[%s1 + $0x8] sm:$0xff]
    %v56 = vperm.slane %v53, 0
    %vm57 = vcmask 130048
    %v59 = vsel %vm57, %v21, 0
    %v62 = vsel %vm57, %v22, 0
    %v65 = vsel %vm57, %v23, 0
    %v68 = vsel %vm57, %v24, 0
    %v71 = vsel %vm57, %v25, 0
    %v74 = vsel %vm57, %v26, 0
    %v77 = vsel %vm57, %v27, 0
    %v80 = vsel %vm57, %v28, 0
    %v83 = vsel %vm57, %v29, 0
    %v86 = vsel %vm57, %v30, 0
    %v89 = vsel %vm57, %v31, 0
    %v92 = vsel %vm57, %v32, 0
    %v95 = vsel %vm57, %v33, 0
    %v98 = vsel %vm57, %v34, 0
    %v101 = vsel %vm57, %v35, 0
    %v104 = vsel %vm57, %v36, 0
    %v107 = vsel %vm57, %v37, 0
    %v110 = vsel %vm57, %v38, 0
    %v113 = vsel %vm57, %v39, 0
    %v116 = vsel %vm57, %v40, 0
    %v119 = vsel %vm57, %v41, 0
    %v122 = vsel %vm57, %v42, 0
    %v125 = vsel %vm57, %v43, 0
    %v128 = vsel %vm57, %v44, 0
    %v131 = vsel %vm57, %v45, 0
    %v134 = vsel %vm57, %v46, 0
    %v137 = vsel %vm57, %v47, 0
    %v140 = vsel %vm57, %v48, 0
    %v143 = vsel %vm57, %v49, 0
    %v146 = vsel %vm57, %v50, 0
    %v149 = vsel %vm57, %v51, 0
    %v152 = vsel %vm57, %v52, 0
    %154 = vmatpush.msra.mxu0 0.0
    %155 = vmatpush.msra.mxu0 0.0
    %156 = vmatpush.msra.mxu0 0.0
    %157 = vmatpush.msra.mxu0 0.0
    %158 = vmatpush.msra.mxu0 0.0
    %159 = vmatpush.msra.mxu0 0.0
    %160 = vmatpush.msra.mxu0 0.0
    %161 = vmatpush.msra.mxu0 0.0
    %162 = vmatpush.msra.mxu0 0.0
    %163 = vmatpush.msra.mxu0 0.0
    %164 = vmatpush.msra.mxu0 0.0
    %165 = vmatpush.msra.mxu0 0.0
    %166 = vmatpush.msra.mxu0 0.0
    %167 = vmatpush.msra.mxu0 0.0
    %168 = vmatpush.msra.mxu0 %v55
    %169 = vmatpush.msra.mxu0 %v54
    %170 = vmatmul.f32.gmra.mxu0 %v59
    %v171 = vpop.f32.mrf.mxu0
    %v172 = vadd.f32 %v56, %v171
    %173 = vmatmul.f32.gmra.mxu0 %v62
    %v174 = vpop.f32.mrf.mxu0
    %v175 = vadd.f32 %v56, %v174
    %176 = vmatmul.f32.gmra.mxu0 %v65
    %v177 = vpop.f32.mrf.mxu0
    %v178 = vadd.f32 %v56, %v177
    %179 = vmatmul.f32.gmra.mxu0 %v68
    %v180 = vpop.f32.mrf.mxu0
    %v181 = vadd.f32 %v56, %v180
    %182 = vmatmul.f32.gmra.mxu0 %v71
    %v183 = vpop.f32.mrf.mxu0
    %v184 = vadd.f32 %v56, %v183
    %185 = vmatmul.f32.gmra.mxu0 %v74
    %v186 = vpop.f32.mrf.mxu0
    %v187 = vadd.f32 %v56, %v186
    %188 = vmatmul.f32.gmra.mxu0 %v77
    %v189 = vpop.f32.mrf.mxu0
    %v190 = vadd.f32 %v56, %v189
    %191 = vmatmul.f32.gmra.mxu0 %v80
    %v192 = vpop.f32.mrf.mxu0
    %v193 = vadd.f32 %v56, %v192
    %194 = vmatmul.f32.gmra.mxu0 %v83
    %v195 = vpop.f32.mrf.mxu0
    %v196 = vadd.f32 %v56, %v195
    %197 = vmatmul.f32.gmra.mxu0 %v86
    %v198 = vpop.f32.mrf.mxu0
    %v199 = vadd.f32 %v56, %v198
    %200 = vmatmul.f32.gmra.mxu0 %v89
    %v201 = vpop.f32.mrf.mxu0
    %v202 = vadd.f32 %v56, %v201
    %203 = vmatmul.f32.gmra.mxu0 %v92
    %v204 = vpop.f32.mrf.mxu0
    %v205 = vadd.f32 %v56, %v204
    %206 = vmatmul.f32.gmra.mxu0 %v95
    %v207 = vpop.f32.mrf.mxu0
    %v208 = vadd.f32 %v56, %v207
    %209 = vmatmul.f32.gmra.mxu0 %v98
    %v210 = vpop.f32.mrf.mxu0
    %v211 = vadd.f32 %v56, %v210
    %212 = vmatmul.f32.gmra.mxu0 %v101
    %v213 = vpop.f32.mrf.mxu0
    %v214 = vadd.f32 %v56, %v213
    %215 = vmatmul.f32.gmra.mxu0 %v104
    %v216 = vpop.f32.mrf.mxu0
    %v217 = vadd.f32 %v56, %v216
    %218 = vmatmul.f32.gmra.mxu0 %v107
    %v219 = vpop.f32.mrf.mxu0
    %v220 = vadd.f32 %v56, %v219
    %221 = vmatmul.f32.gmra.mxu0 %v110
    %v222 = vpop.f32.mrf.mxu0
    %v223 = vadd.f32 %v56, %v222
    %224 = vmatmul.f32.gmra.mxu0 %v113
    %v225 = vpop.f32.mrf.mxu0
    %v226 = vadd.f32 %v56, %v225
    %227 = vmatmul.f32.gmra.mxu0 %v116
    %v228 = vpop.f32.mrf.mxu0
    %v229 = vadd.f32 %v56, %v228
    %230 = vmatmul.f32.gmra.mxu0 %v119
    %v231 = vpop.f32.mrf.mxu0
    %v232 = vadd.f32 %v56, %v231
    %233 = vmatmul.f32.gmra.mxu0 %v122
    %v234 = vpop.f32.mrf.mxu0
    %v235 = vadd.f32 %v56, %v234
    %236 = vmatmul.f32.gmra.mxu0 %v125
    %v237 = vpop.f32.mrf.mxu0
    %v238 = vadd.f32 %v56, %v237
    %239 = vmatmul.f32.gmra.mxu0 %v128
    %v240 = vpop.f32.mrf.mxu0
    %v241 = vadd.f32 %v56, %v240
    %242 = vmatmul.f32.gmra.mxu0 %v131
    %v243 = vpop.f32.mrf.mxu0
    %v244 = vadd.f32 %v56, %v243
    %245 = vmatmul.f32.gmra.mxu0 %v134
    %v246 = vpop.f32.mrf.mxu0
    %v247 = vadd.f32 %v56, %v246
    %248 = vmatmul.f32.gmra.mxu0 %v137
    %v249 = vpop.f32.mrf.mxu0
    %v250 = vadd.f32 %v56, %v249
    %251 = vmatmul.f32.gmra.mxu0 %v140
    %v252 = vpop.f32.mrf.mxu0
    %v253 = vadd.f32 %v56, %v252
    %254 = vmatmul.f32.gmra.mxu0 %v143
    %v255 = vpop.f32.mrf.mxu0
    %v256 = vadd.f32 %v56, %v255
    %257 = vmatmul.f32.gmra.mxu0 %v146
    %v258 = vpop.f32.mrf.mxu0
    %v259 = vadd.f32 %v56, %v258
    %260 = vmatmul.f32.gmra.mxu0 %v149
    %v261 = vpop.f32.mrf.mxu0
    %v262 = vadd.f32 %v56, %v261
    %263 = vmatmul.f32.gmra.mxu0 %v152
    %v264 = vpop.f32.mrf.mxu0
    %v265 = vadd.f32 %v56, %v264
    %266 = vdwg.mxu0
    %v267 = vmax.f32 %v172, 0.0
    %v268 = vmax.f32 %v175, 0.0
    %v269 = vmax.f32 %v178, 0.0
    %v270 = vmax.f32 %v181, 0.0
    %v271 = vmax.f32 %v184, 0.0
    %v272 = vmax.f32 %v187, 0.0
    %v273 = vmax.f32 %v190, 0.0
    %v274 = vmax.f32 %v193, 0.0
    %v275 = vmax.f32 %v196, 0.0
    %v276 = vmax.f32 %v199, 0.0
    %v277 = vmax.f32 %v202, 0.0
    %v278 = vmax.f32 %v205, 0.0
    %v279 = vmax.f32 %v208, 0.0
    %v280 = vmax.f32 %v211, 0.0
    %v281 = vmax.f32 %v214, 0.0
    %v282 = vmax.f32 %v217, 0.0
    %v283 = vmax.f32 %v220, 0.0
    %v284 = vmax.f32 %v223, 0.0
    %v285 = vmax.f32 %v226, 0.0
    %v286 = vmax.f32 %v229, 0.0
    %v287 = vmax.f32 %v232, 0.0
    %v288 = vmax.f32 %v235, 0.0
    %v289 = vmax.f32 %v238, 0.0
    %v290 = vmax.f32 %v241, 0.0
    %v291 = vmax.f32 %v244, 0.0
    %v292 = vmax.f32 %v247, 0.0
    %v293 = vmax.f32 %v250, 0.0
    %v294 = vmax.f32 %v253, 0.0
    %v295 = vmax.f32 %v256, 0.0
    %v296 = vmax.f32 %v259, 0.0
    %v297 = vmax.f32 %v262, 0.0
    %v298 = vmax.f32 %v265, 0.0
    %v299 = vld [vmem:[%s4 + $0x1] sm:$0x1]
    %v300 = vld [vmem:[%s2] sm:$0xff]
    %v301 = vld [vmem:[%s2 + $0x8] sm:$0xff]
    %v302 = vld [vmem:[%s2 + $0x10] sm:$0xff]
    %v303 = vld [vmem:[%s2 + $0x18] sm:$0xff]
    %v304 = vld [vmem:[%s2 + $0x20] sm:$0xff]
    %v305 = vld [vmem:[%s2 + $0x28] sm:$0xff]
    %v306 = vld [vmem:[%s2 + $0x30] sm:$0xff]
    %v307 = vld [vmem:[%s2 + $0x38] sm:$0xff]
    %v308 = vld [vmem:[%s2 + $0x40] sm:$0xff]
    %v309 = vld [vmem:[%s2 + $0x48] sm:$0xff]
    %v310 = vld [vmem:[%s2 + $0x50] sm:$0xff]
    %v311 = vld [vmem:[%s2 + $0x58] sm:$0xff]
    %v312 = vld [vmem:[%s2 + $0x60] sm:$0xff]
    %v313 = vld [vmem:[%s2 + $0x68] sm:$0xff]
    %v314 = vld [vmem:[%s2 + $0x70] sm:$0xff]
    %v315 = vld [vmem:[%s2 + $0x78] sm:$0xff]
    %v316 = vperm.slane %v299, 0
    %317 = vmatpush.msra.mxu0 %v315
    %318 = vmatpush.msra.mxu0 %v314
    %319 = vmatpush.msra.mxu0 %v313
    %320 = vmatpush.msra.mxu0 %v312
    %321 = vmatpush.msra.mxu0 %v311
    %322 = vmatpush.msra.mxu0 %v310
    %323 = vmatpush.msra.mxu0 %v309
    %324 = vmatpush.msra.mxu0 %v308
    %325 = vmatpush.msra.mxu0 %v307
    %326 = vmatpush.msra.mxu0 %v306
    %327 = vmatpush.msra.mxu0 %v305
    %328 = vmatpush.msra.mxu0 %v304
    %329 = vmatpush.msra.mxu0 %v303
    %330 = vmatpush.msra.mxu0 %v302
    %331 = vmatpush.msra.mxu0 %v301
    %332 = vmatpush.msra.mxu0 %v300
    %333 = vmatmul.f32.gmra.mxu0 %v267
    %v334 = vpop.f32.mrf.mxu0
    %v335 = vadd.f32 %v316, %v334
    %336 = vmatmul.f32.gmra.mxu0 %v268
    %v337 = vpop.f32.mrf.mxu0
    %v338 = vadd.f32 %v316, %v337
    %339 = vmatmul.f32.gmra.mxu0 %v269
    %v340 = vpop.f32.mrf.mxu0
    %v341 = vadd.f32 %v316, %v340
    %342 = vmatmul.f32.gmra.mxu0 %v270
    %v343 = vpop.f32.mrf.mxu0
    %v344 = vadd.f32 %v316, %v343
    %345 = vmatmul.f32.gmra.mxu0 %v271
    %v346 = vpop.f32.mrf.mxu0
    %v347 = vadd.f32 %v316, %v346
    %348 = vmatmul.f32.gmra.mxu0 %v272
    %v349 = vpop.f32.mrf.mxu0
    %v350 = vadd.f32 %v316, %v349
    %351 = vmatmul.f32.gmra.mxu0 %v273
    %v352 = vpop.f32.mrf.mxu0
    %v353 = vadd.f32 %v316, %v352
    %354 = vmatmul.f32.gmra.mxu0 %v274
    %v355 = vpop.f32.mrf.mxu0
    %v356 = vadd.f32 %v316, %v355
    %357 = vmatmul.f32.gmra.mxu0 %v275
    %v358 = vpop.f32.mrf.mxu0
    %v359 = vadd.f32 %v316, %v358
    %360 = vmatmul.f32.gmra.mxu0 %v276
    %v361 = vpop.f32.mrf.mxu0
    %v362 = vadd.f32 %v316, %v361
    %363 = vmatmul.f32.gmra.mxu0 %v277
    %v364 = vpop.f32.mrf.mxu0
    %v365 = vadd.f32 %v316, %v364
    %366 = vmatmul.f32.gmra.mxu0 %v278
    %v367 = vpop.f32.mrf.mxu0
    %v368 = vadd.f32 %v316, %v367
    %369 = vmatmul.f32.gmra.mxu0 %v279
    %v370 = vpop.f32.mrf.mxu0
    %v371 = vadd.f32 %v316, %v370
    %372 = vmatmul.f32.gmra.mxu0 %v280
    %v373 = vpop.f32.mrf.mxu0
    %v374 = vadd.f32 %v316, %v373
    %375 = vmatmul.f32.gmra.mxu0 %v281
    %v376 = vpop.f32.mrf.mxu0
    %v377 = vadd.f32 %v316, %v376
    %378 = vmatmul.f32.gmra.mxu0 %v282
    %v379 = vpop.f32.mrf.mxu0
    %v380 = vadd.f32 %v316, %v379
    %381 = vmatmul.f32.gmra.mxu0 %v283
    %v382 = vpop.f32.mrf.mxu0
    %v383 = vadd.f32 %v316, %v382
    %384 = vmatmul.f32.gmra.mxu0 %v284
    %v385 = vpop.f32.mrf.mxu0
    %v386 = vadd.f32 %v316, %v385
    %387 = vmatmul.f32.gmra.mxu0 %v285
    %v388 = vpop.f32.mrf.mxu0
    %v389 = vadd.f32 %v316, %v388
    %390 = vmatmul.f32.gmra.mxu0 %v286
    %v391 = vpop.f32.mrf.mxu0
    %v392 = vadd.f32 %v316, %v391
    %393 = vmatmul.f32.gmra.mxu0 %v287
    %v394 = vpop.f32.mrf.mxu0
    %v395 = vadd.f32 %v316, %v394
    %396 = vmatmul.f32.gmra.mxu0 %v288
    %v397 = vpop.f32.mrf.mxu0
    %v398 = vadd.f32 %v316, %v397
    %399 = vmatmul.f32.gmra.mxu0 %v289
    %v400 = vpop.f32.mrf.mxu0
    %v401 = vadd.f32 %v316, %v400
    %402 = vmatmul.f32.gmra.mxu0 %v290
    %v403 = vpop.f32.mrf.mxu0
    %v404 = vadd.f32 %v316, %v403
    %405 = vmatmul.f32.gmra.mxu0 %v291
    %v406 = vpop.f32.mrf.mxu0
    %v407 = vadd.f32 %v316, %v406
    %408 = vmatmul.f32.gmra.mxu0 %v292
    %v409 = vpop.f32.mrf.mxu0
    %v410 = vadd.f32 %v316, %v409
    %411 = vmatmul.f32.gmra.mxu0 %v293
    %v412 = vpop.f32.mrf.mxu0
    %v413 = vadd.f32 %v316, %v412
    %414 = vmatmul.f32.gmra.mxu0 %v294
    %v415 = vpop.f32.mrf.mxu0
    %v416 = vadd.f32 %v316, %v415
    %417 = vmatmul.f32.gmra.mxu0 %v295
    %v418 = vpop.f32.mrf.mxu0
    %v419 = vadd.f32 %v316, %v418
    %420 = vmatmul.f32.gmra.mxu0 %v296
    %v421 = vpop.f32.mrf.mxu0
    %v422 = vadd.f32 %v316, %v421
    %423 = vmatmul.f32.gmra.mxu0 %v297
    %v424 = vpop.f32.mrf.mxu0
    %v425 = vadd.f32 %v316, %v424
    %426 = vmatmul.f32.gmra.mxu0 %v298
    %v427 = vpop.f32.mrf.mxu0
    %v428 = vadd.f32 %v316, %v427
    %429 = vdwg.mxu0
    %v430 = vmax.f32 %v335, 0.0
    %v431 = vmax.f32 %v338, 0.0
    %v432 = vmax.f32 %v341, 0.0
    %v433 = vmax.f32 %v344, 0.0
    %v434 = vmax.f32 %v347, 0.0
    %v435 = vmax.f32 %v350, 0.0
    %v436 = vmax.f32 %v353, 0.0
    %v437 = vmax.f32 %v356, 0.0
    %v438 = vmax.f32 %v359, 0.0
    %v439 = vmax.f32 %v362, 0.0
    %v440 = vmax.f32 %v365, 0.0
    %v441 = vmax.f32 %v368, 0.0
    %v442 = vmax.f32 %v371, 0.0
    %v443 = vmax.f32 %v374, 0.0
    %v444 = vmax.f32 %v377, 0.0
    %v445 = vmax.f32 %v380, 0.0
    %v446 = vmax.f32 %v383, 0.0
    %v447 = vmax.f32 %v386, 0.0
    %v448 = vmax.f32 %v389, 0.0
    %v449 = vmax.f32 %v392, 0.0
    %v450 = vmax.f32 %v395, 0.0
    %v451 = vmax.f32 %v398, 0.0
    %v452 = vmax.f32 %v401, 0.0
    %v453 = vmax.f32 %v404, 0.0
    %v454 = vmax.f32 %v407, 0.0
    %v455 = vmax.f32 %v410, 0.0
    %v456 = vmax.f32 %v413, 0.0
    %v457 = vmax.f32 %v416, 0.0
    %v458 = vmax.f32 %v419, 0.0
    %v459 = vmax.f32 %v422, 0.0
    %v460 = vmax.f32 %v425, 0.0
    %v461 = vmax.f32 %v428, 0.0
    %v462 = vld [vmem:[%s3] sm:$0xff]
    %v463 = vld [vmem:[%s4 + $0x2] sm:$0x1]
    %s465 = vtos %v463
    %v466 = vstv %s465
    %468 = vmatpush.xpose.msra.mxu0 %v445
    %469 = vmatpush.xpose.msra.mxu0 %v444
    %470 = vmatpush.xpose.msra.mxu0 %v443
    %471 = vmatpush.xpose.msra.mxu0 %v442
    %472 = vmatpush.xpose.msra.mxu0 %v441
    %473 = vmatpush.xpose.msra.mxu0 %v440
    %474 = vmatpush.xpose.msra.mxu0 %v439
    %475 = vmatpush.xpose.msra.mxu0 %v438
    %476 = vmatpush.xpose.msra.mxu0 %v437
    %477 = vmatpush.xpose.msra.mxu0 %v436
    %478 = vmatpush.xpose.msra.mxu0 %v435
    %479 = vmatpush.xpose.msra.mxu0 %v434
    %480 = vmatpush.xpose.msra.mxu0 %v433
    %481 = vmatpush.xpose.msra.mxu0 %v432
    %482 = vmatpush.xpose.msra.mxu0 %v431
    %483 = vmatpush.xpose.msra.mxu0 %v430
    %484 = vmatmul.f32.gmra.mxu0 %v462
    %v485 = vpop.f32.mrf.mxu0
    %v486 = vadd.f32 %v466, %v485
    %487 = vdwg.mxu0
    %488 = vmatpush.xpose.msra.mxu0 %v461
    %489 = vmatpush.xpose.msra.mxu0 %v460
    %490 = vmatpush.xpose.msra.mxu0 %v459
    %491 = vmatpush.xpose.msra.mxu0 %v458
    %492 = vmatpush.xpose.msra.mxu0 %v457
    %493 = vmatpush.xpose.msra.mxu0 %v456
    %494 = vmatpush.xpose.msra.mxu0 %v455
    %495 = vmatpush.xpose.msra.mxu0 %v454
    %496 = vmatpush.xpose.msra.mxu0 %v453
    %497 = vmatpush.xpose.msra.mxu0 %v452
    %498 = vmatpush.xpose.msra.mxu0 %v451
    %499 = vmatpush.xpose.msra.mxu0 %v450
    %500 = vmatpush.xpose.msra.mxu0 %v449
    %501 = vmatpush.xpose.msra.mxu0 %v448
    %502 = vmatpush.xpose.msra.mxu0 %v447
    %503 = vmatpush.xpose.msra.mxu0 %v446
    %504 = vmatmul.f32.gmra.mxu0 %v462
    %v505 = vpop.f32.mrf.mxu0
    %v506 = vadd.f32 %v466, %v505
    %507 = vdwg.mxu0
    %508 = vst [vmem:[#allocation2] sm:$0xff] %v486
    %509 = vst [vmem:[#allocation2 + $0x8] sm:$0xff] %v506
    // Predicated region
    $region22: #{tpu_custom_call.1} parent=1 // pred_check
      _
    $region23: #{tpu_custom_call.1} parent=1 // pred_check_branch
      %511 = sbr.rel (0) target = $region25
    $region24: #{tpu_custom_call.1} parent=1 // pred_region
      %513 = vsyncadd [#allocation3], 0
      %s515 = sshll.u32 [#allocation2], 4
      %s516 = int_to_ptr.vmem [resolvable:$true] %s515
      %s517 = sshll.u32 %s5, 4
      %s518 = int_to_ptr.hbm [resolvable:$true] %s517
      %520 = dma.vmem_to_hbm [thread:$0]  %s516, 256, %s518, [#allocation3]
    $region25: #{tpu_custom_call.1} parent=1 // pred_fallthru
      _
    // Predicated region
    $region26: #{tpu_custom_call.1} parent=1 // pred_check
      _
    $region27: #{tpu_custom_call.1} parent=1 // pred_check_branch
      %522 = sbr.rel (0) target = $region29
    $region28: #{tpu_custom_call.1} parent=1 // pred_region
      %524 = dma.done [#allocation3], 256
    $region29: #{tpu_custom_call.1} parent=1 // pred_fallthru
      _
    %525 = vsyncpa [#allocation3], 1

</llo_original>
